<compile_context>
chip_gen: v7x
topology: tpu7x:2x2x1
jax: 0.10.0
libtpu: 0.0.40
codegen_flags: <defaults>
</compile_context>

<pallas_src>
import jax
import jax.numpy as jnp
from jax.experimental import pallas as pl
from jax.experimental.pallas import tpu as pltpu


GROUP = 8                    # rows folded into lanes: GROUP * O = 128 output lanes
MAX_TILE_G = 8192            # hard cap on folded rows per grid step
VMEM_CAP_BYTES = 48 << 20    # never request more scoped VMEM than this


def _round_up(n, m):
    return ((n + m - 1) // m) * m


def _sublane_multiple(dtype):
    # f32 -> 8, bf16 -> 16, int8/fp8 -> 32 (sub-32-bit dtypes pack along sublanes).
    return max(8, 32 // jnp.dtype(dtype).itemsize)


def _vmem_limit_bytes():
    # <= 3/4 of physical VMEM (v5e/v6e: 128 MiB, v7x: 64 MiB), capped at 48 MiB.
    try:
        phys = pltpu.get_tpu_info().vmem_capacity_bytes
    except Exception:
        phys = 64 << 20
    return int(min(VMEM_CAP_BYTES, (phys * 3) // 4))


def _row_axis_semantics():
    # v7x has 2 TensorCores per chip; CORE_PARALLEL is what actually shards the
    # row-tile grid across them.  Single-core generations keep plain "parallel".
    try:
        kind = jax.devices()[0].device_kind.lower()
    except Exception:
        kind = ""
    core_parallel = getattr(pltpu, "CORE_PARALLEL", None)
    if "7" in kind and core_parallel is not None:
        return (core_parallel,)
    return ("parallel",)


def _pick_tile(rows_g, sub, itemsize, gf, gh, go, vmem_budget):
    """Folded-row tile: as big as the VMEM budget allows, >=2 grid steps if possible."""
    # Per-folded-row VMEM: double-buffered in/out blocks + f32 intermediates (h, y)
    # + a possible low-precision copy of h feeding the second matmul.
    per_row = 2 * (gf + go) * itemsize + (gh + go) * 4 + gh * itemsize
    weights = 2 * (gf * gh + gh * go + gh + go) * itemsize
    avail = max(vmem_budget - weights - (6 << 20), 2 << 20)
    cap = max(sub, min(MAX_TILE_G, (avail // per_row) // sub * sub))
    if rows_g <= sub:
        return sub
    # Prefer >= 2 grid steps (megacore sharding on v7x, pipeline overlap).
    tile = _round_up(pl.cdiv(rows_g, 2), sub)
    return int(min(cap, tile))


def _shared_mlp_kernel(xg_ref, w1_ref, b1_ref, w2_ref, b2_ref, o_ref):
    # xg: (TG, G*F)  w1: (G*F, G*H)  b1: (1, G*H)  w2: (G*H, G*O)  b2: (1, G*O)
    # o : (TG, G*O=128) -> lane-dense, unmasked stores.
    # Matmuls in the operands' native dtype (bf16 -> native MXU path);
    # bias-add / ReLU / accumulation in f32.
    h = jnp.dot(xg_ref[...], w1_ref[...], preferred_element_type=jnp.float32)
    h = jnp.maximum(h + b1_ref[...].astype(jnp.float32), 0.0)
    y = jnp.dot(h.astype(w2_ref.dtype), w2_ref[...],
                preferred_element_type=jnp.float32)
    o_ref[...] = (y + b2_ref[...].astype(jnp.float32)).astype(o_ref.dtype)


def init_params(key, in_features, hidden, out_features, dtype=jnp.float32):
    """Deterministic PyTorch-nn.Linear-style uniform init."""
    k1, k2, k3, k4 = jax.random.split(key, 4)
    lim1 = 1.0 / jnp.sqrt(in_features)
    lim2 = 1.0 / jnp.sqrt(hidden)
    w1 = jax.random.uniform(k1, (in_features, hidden), jnp.float32, -lim1, lim1)
    b1 = jax.random.uniform(k2, (1, hidden), jnp.float32, -lim1, lim1)
    w2 = jax.random.uniform(k3, (hidden, out_features), jnp.float32, -lim2, lim2)
    b2 = jax.random.uniform(k4, (1, out_features), jnp.float32, -lim2, lim2)
    return tuple(p.astype(dtype) for p in (w1, b1, w2, b2))


def _block_diag(w, g):
    k, n = w.shape
    eye = jnp.eye(g, dtype=w.dtype)
    # bd[s*k + f, t*n + j] = (s == t) * w[f, j]   (exact: products with 0.0/1.0)
    return jnp.einsum("st,kn->sktn", eye, w).reshape(g * k, g * n).astype(w.dtype)


def pack_params(params, group=GROUP):
    """Build the lane-dense (block-diagonal) weights once, outside the hot path."""
    w1, b1, w2, b2 = params
    return (_block_diag(w1, group), jnp.tile(b1, (1, group)),
            _block_diag(w2, group), jnp.tile(b2, (1, group)))


@jax.jit
def shared_weight_forward(x, packed_params):
    """SharedWeightModel.forward: y = model(x.unsqueeze(1)).squeeze(1).

    The agent axis (size 1) is dropped — it is purely notational; every row of
    x hits the same shared weights inside the kernel.
    """
    w1_bd, b1_t, w2_bd, b2_t = packed_params
    R, F = x.shape
    GF, GH = w1_bd.shape
    GO = w2_bd.shape[1]
    G = GF // F
    O = GO // G

    # Fold G consecutive rows into the lane dimension (row-major view of x).
    # The pad is a no-op whenever R is a multiple of G (the common case) and
    # trivial (< G rows) otherwise.
    R_pad = _round_up(max(R, G), G)
    if R_pad != R:
        x = jnp.pad(x, ((0, R_pad - R), (0, 0)))
    rows_g = R_pad // G
    xg = x.reshape(rows_g, G * F)

    itemsize = jnp.dtype(x.dtype).itemsize
    sub = _sublane_multiple(x.dtype)
    vmem_limit = _vmem_limit_bytes()
    tile_g = _pick_tile(rows_g, sub, itemsize, GF, GH, GO, vmem_limit)
    # Ragged last block: Pallas pads the edge reads and masks the edge writes,
    # so no full-array jnp.pad / out-slice round trip is needed.
    grid = (pl.cdiv(rows_g, tile_g),)

    cost = pl.CostEstimate(
        flops=2 * rows_g * (GF * GH + GH * GO),
        transcendentals=0,
        bytes_accessed=(int(xg.size) * itemsize
                        + sum(int(p.size) * jnp.dtype(p.dtype).itemsize
                              for p in packed_params)
                        + rows_g * GO * itemsize))

    out = pl.pallas_call(
        _shared_mlp_kernel,
        out_shape=jax.ShapeDtypeStruct((rows_g, GO), x.dtype),
        grid=grid,
        in_specs=[
            pl.BlockSpec((tile_g, GF), lambda i: (i, 0)),   # streamed row tiles
            pl.BlockSpec((GF, GH), lambda i: (0, 0)),       # shared weights stay
            pl.BlockSpec((1, GH), lambda i: (0, 0)),        # resident across the
            pl.BlockSpec((GH, GO), lambda i: (0, 0)),       # whole grid
            pl.BlockSpec((1, GO), lambda i: (0, 0)),
        ],
        out_specs=pl.BlockSpec((tile_g, GO), lambda i: (i, 0)),  # lane-dense (GO=128)
        compiler_params=pltpu.CompilerParams(
            dimension_semantics=_row_axis_semantics(),
            vmem_limit_bytes=vmem_limit),
        cost_estimate=cost,
    )(xg, w1_bd, b1_t, w2_bd, b2_t)

    # Row-major unfold back to (rows, O); slice only if a trivial pad was added.
    y = out.reshape(R_pad, O)
    return y[:R] if R_pad != R else y


def reference_forward(x, params):
    """Pure-JAX reference in f32 (mirrors the PyTorch wrapper semantics)."""
    w1, b1, w2, b2 = params
    _x = x[:, None, :].astype(jnp.float32)                 # unsqueeze(1)
    h = jnp.maximum(_x @ w1.astype(jnp.float32) + b1.astype(jnp.float32), 0.0)
    _y = h @ w2.astype(jnp.float32) + b2.astype(jnp.float32)
    return _y[:, 0, :]                                     # squeeze(1)


if __name__ == "__main__":
    key = jax.random.PRNGKey(0)
    kx, kp = jax.random.split(key)

    B, F, H, O = 2, 32, 64, 16

    # --- f32 path (strict check against reference) ---
    x = jax.random.normal(kx, (B, F), dtype=jnp.float32)
    params = init_params(kp, F, H, O, dtype=jnp.float32)
    packed = pack_params(params)

    y = jax.block_until_ready(shared_weight_forward(x, packed))
    y_ref = reference_forward(x, params)
    assert y.shape == (B, O), y.shape
    assert jnp.allclose(y, y_ref, atol=1e-5, rtol=1e-5)

    # --- bf16 path (native MXU inputs, f32 accumulate in-kernel) ---
    x_bf = x.astype(jnp.bfloat16)
    params_bf = tuple(p.astype(jnp.bfloat16) for p in params)
    packed_bf = pack_params(params_bf)
    y_bf = jax.block_until_ready(shared_weight_forward(x_bf, packed_bf))
    y_bf_ref = reference_forward(x_bf, params_bf)
    assert y_bf.shape == (B, O), y_bf.shape
    assert jnp.allclose(y_bf.astype(jnp.float32), y_bf_ref, atol=5e-2, rtol=5e-2)

    print("KERNEL_OK")
</pallas_src>

<mosaic_0001>
module attributes {stable_mosaic.version = 11 : i64} {
  func.func @_shared_mlp_kernel(%arg0: i32, %arg1: memref<8x256xf32, #tpu.memory_space<vmem>>, %arg2: memref<256x512xf32, #tpu.memory_space<vmem>>, %arg3: memref<1x512xf32, #tpu.memory_space<vmem>>, %arg4: memref<512x128xf32, #tpu.memory_space<vmem>>, %arg5: memref<1x128xf32, #tpu.memory_space<vmem>>, %arg6: memref<8x128xf32, #tpu.memory_space<vmem>>) attributes {dimension_semantics = [#tpu.dimension_semantics<parallel>], iteration_bounds = array<i64: 1>, scalar_prefetch = 0 : i64, scratch_operands = 0 : i64, tpu.core_type = #tpu.core_type<tc>, window_params = [{transform_indices = @transform_0, window_bounds = array<i64: 8, 256>}, {pipeline_mode = #tpu.pipeline_mode<synchronous>, transform_indices = @transform_1, window_bounds = array<i64: 256, 512>}, {pipeline_mode = #tpu.pipeline_mode<synchronous>, transform_indices = @transform_2, window_bounds = array<i64: 1, 512>}, {pipeline_mode = #tpu.pipeline_mode<synchronous>, transform_indices = @transform_3, window_bounds = array<i64: 512, 128>}, {pipeline_mode = #tpu.pipeline_mode<synchronous>, transform_indices = @transform_4, window_bounds = array<i64: 1, 128>}, {transform_indices = @transform_5, window_bounds = array<i64: 8, 128>}]} {
    %c0 = arith.constant 0 : index
    %c0_0 = arith.constant 0 : index
    %0 = vector.load %arg1[%c0, %c0_0] : memref<8x256xf32, #tpu.memory_space<vmem>>, vector<8x256xf32>
    %c0_1 = arith.constant 0 : index
    %c0_2 = arith.constant 0 : index
    %1 = vector.load %arg2[%c0_1, %c0_2] : memref<256x512xf32, #tpu.memory_space<vmem>>, vector<256x512xf32>
    %cst = arith.constant dense<0.000000e+00> : vector<8x512xf32>
    %2 = tpu.matmul %0, %1, %cst {dimension_numbers = #tpu.dot_dimension_numbers<[1], [0], [0], [1], [0, 0, 1, 1], [], []>} : vector<8x256xf32>, vector<256x512xf32>, vector<8x512xf32> -> vector<8x512xf32>
    %c0_3 = arith.constant 0 : index
    %c0_4 = arith.constant 0 : index
    %3 = vector.load %arg3[%c0_3, %c0_4] : memref<1x512xf32, #tpu.memory_space<vmem>>, vector<1x512xf32>
    %4 = vector.broadcast %3 : vector<1x512xf32> to vector<8x512xf32>
    %5 = arith.addf %2, %4 : vector<8x512xf32>
    %cst_5 = arith.constant 0.000000e+00 : f32
    %6 = vector.broadcast %cst_5 : f32 to vector<8x512xf32>
    %7 = arith.maximumf %5, %6 : vector<8x512xf32>
    %c0_6 = arith.constant 0 : index
    %c0_7 = arith.constant 0 : index
    %8 = vector.load %arg4[%c0_6, %c0_7] : memref<512x128xf32, #tpu.memory_space<vmem>>, vector<512x128xf32>
    %cst_8 = arith.constant dense<0.000000e+00> : vector<8x128xf32>
    %9 = tpu.matmul %7, %8, %cst_8 {dimension_numbers = #tpu.dot_dimension_numbers<[1], [0], [0], [1], [0, 0, 1, 1], [], []>} : vector<8x512xf32>, vector<512x128xf32>, vector<8x128xf32> -> vector<8x128xf32>
    %c0_9 = arith.constant 0 : index
    %c0_10 = arith.constant 0 : index
    %10 = vector.load %arg5[%c0_9, %c0_10] : memref<1x128xf32, #tpu.memory_space<vmem>>, vector<1x128xf32>
    %11 = vector.broadcast %10 : vector<1x128xf32> to vector<8x128xf32>
    %12 = arith.addf %9, %11 : vector<8x128xf32>
    %c0_11 = arith.constant 0 : index
    %c0_12 = arith.constant 0 : index
    %13 = vector.load %arg6[%c0_11, %c0_12] : memref<8x128xf32, #tpu.memory_space<vmem>>, vector<8x128xf32>
    tpu.vector_store %arg6[%c0_11, %c0_12], %12 {strides = array<i32>} : memref<8x128xf32, #tpu.memory_space<vmem>>, vector<8x128xf32>,
    return
  }
  func.func @transform_0(%arg0: i32) -> (i32, i32) {
    %c0_i32 = arith.constant 0 : i32
    %c0_i32_0 = arith.constant 0 : i32
    return %arg0, %c0_i32 : i32, i32
  }
  func.func @transform_1(%arg0: i32) -> (i32, i32) {
    %c0_i32 = arith.constant 0 : i32
    %c0_i32_0 = arith.constant 0 : i32
    %c0_i32_1 = arith.constant 0 : i32
    return %c0_i32, %c0_i32_0 : i32, i32
  }
  func.func @transform_2(%arg0: i32) -> (i32, i32) {
    %c0_i32 = arith.constant 0 : i32
    %c0_i32_0 = arith.constant 0 : i32
    %c0_i32_1 = arith.constant 0 : i32
    return %c0_i32, %c0_i32_0 : i32, i32
  }
  func.func @transform_3(%arg0: i32) -> (i32, i32) {
    %c0_i32 = arith.constant 0 : i32
    %c0_i32_0 = arith.constant 0 : i32
    %c0_i32_1 = arith.constant 0 : i32
    return %c0_i32, %c0_i32_0 : i32, i32
  }
  func.func @transform_4(%arg0: i32) -> (i32, i32) {
    %c0_i32 = arith.constant 0 : i32
    %c0_i32_0 = arith.constant 0 : i32
    %c0_i32_1 = arith.constant 0 : i32
    return %c0_i32, %c0_i32_0 : i32, i32
  }
  func.func @transform_5(%arg0: i32) -> (i32, i32) {
    %c0_i32 = arith.constant 0 : i32
    %c0_i32_0 = arith.constant 0 : i32
    return %arg0, %c0_i32 : i32, i32
  }
}

</mosaic_0001>

<llo_original>
// kernel: shared_weight_forward.1
$region0: #{shared_weight_forward.1}
  #allocation0 [shape = 'u32[]', space=smem, size = 0x4, offset = 0x4, fixed_abs, tag = 'smem constant byte address 0x4 - core index']
  #allocation1 [shape = 'u32[144,128]{1,0:T(1,128)}', space=vmem, size = 0x12000, scoped, tag = 'internal scratch']
  %s0 = inlined_call_operand.vmem [shape: f32[1,256], index: 0, kind: input, shape index: {}]
  %s1 = inlined_call_operand.hbm [shape: f32[256,512], index: 1, kind: input, shape index: {}]
  %s2 = inlined_call_operand.vmem [shape: f32[1,512], index: 2, kind: input, shape index: {}]
  %s3 = inlined_call_operand.hbm [shape: f32[512,128], index: 3, kind: input, shape index: {}]
  %s4 = inlined_call_operand.vmem [shape: f32[1,128], index: 4, kind: input, shape index: {}]
  %s5 = inlined_call_operand.vmem [shape: f32[1,128], index: 5, kind: output, shape index: {}]
  %s6 = sld [smem:[#allocation0]]
  $region68: #{shared_weight_forward.1} parent=0
    _
  %s8 = ssub.s32 1, %s6
  %s9 = scalar_select 0, %s8, %s6
  $region1: #{shared_weight_forward.1} parent=0
    #allocation2 [shape = 'u8[524288]{0}', space=vmem, size = 0x80000, scoped, tag = 'input window, operand 1, single buffered']
    #allocation3 [shape = 's32[1]{0}', space=sflag, size = 0x4, scoped, tag = 'scoped memory for shared_weight_forward.1']
    #allocation4 [shape = 'u8[262144]{0}', space=vmem, size = 0x40000, scoped, tag = 'input window, operand 3, single buffered']
    #allocation5 [shape = 's32[1]{0}', space=sflag, size = 0x4, scoped, tag = 'scoped memory for shared_weight_forward.1']
    #allocation6 [shape = 'u8[4096]{0}', space=vmem, size = 0x1000, scoped, tag = 'output window, operand 0, single buffered']
    %10 = vsyncpa [#allocation3], 0
    %11 = vsyncpa [#allocation5], 0
    // Predicated region
    $region2: #{shared_weight_forward.1} parent=1 // pred_check
      _
    $region3: #{shared_weight_forward.1} parent=1 // pred_check_branch
      %13 = sbr.rel (0) target = $region5
    $region4: #{shared_weight_forward.1} parent=1 // pred_region
      _
    $region5: #{shared_weight_forward.1} parent=1 // pred_fallthru
      _
    // Predicated region
    $region6: #{shared_weight_forward.1} parent=1 // pred_check
      _
    $region7: #{shared_weight_forward.1} parent=1 // pred_check_branch
      %15 = sbr.rel (0) target = $region9
    $region8: #{shared_weight_forward.1} parent=1 // pred_region
      %s17 = ssub.s32 16384, 16384
      %18 = vsyncadd [#allocation3], %s17
      %s19 = sshll.u32 [#allocation2], 4
      %s20 = int_to_ptr.vmem [resolvable:$true] %s19
      %25 = dma.hbm_to_vmem [thread:$0]  %s1, 16384, %s20, [#allocation3], 512, 512, 32
    $region9: #{shared_weight_forward.1} parent=1 // pred_fallthru
      _
    // Predicated region
    $region10: #{shared_weight_forward.1} parent=1 // pred_check
      _
    $region11: #{shared_weight_forward.1} parent=1 // pred_check_branch
      %27 = sbr.rel (0) target = $region13
    $region12: #{shared_weight_forward.1} parent=1 // pred_region
      _
    $region13: #{shared_weight_forward.1} parent=1 // pred_fallthru
      _
    // Predicated region
    $region14: #{shared_weight_forward.1} parent=1 // pred_check
      _
    $region15: #{shared_weight_forward.1} parent=1 // pred_check_branch
      %29 = sbr.rel (0) target = $region17
    $region16: #{shared_weight_forward.1} parent=1 // pred_region
      %s31 = ssub.s32 8192, 8192
      %32 = vsyncadd [#allocation5], %s31
      %s33 = sshll.u32 [#allocation4], 4
      %s34 = int_to_ptr.vmem [resolvable:$true] %s33
      %39 = dma.hbm_to_vmem [thread:$0]  %s3, 8192, %s34, [#allocation5], 128, 128, 8
    $region17: #{shared_weight_forward.1} parent=1 // pred_fallthru
      _
    // Predicated region
    $region18: #{shared_weight_forward.1} parent=1 // pred_check
      _
    $region19: #{shared_weight_forward.1} parent=1 // pred_check_branch
      %41 = sbr.rel (0) target = $region21
    $region20: #{shared_weight_forward.1} parent=1 // pred_region
      _
    $region21: #{shared_weight_forward.1} parent=1 // pred_fallthru
      _
    // Predicated region
    $region22: #{shared_weight_forward.1} parent=1 // pred_check
      _
    $region23: #{shared_weight_forward.1} parent=1 // pred_check_branch
      %43 = sbr.rel (0) target = $region25
    $region24: #{shared_weight_forward.1} parent=1 // pred_region
      %44 = dma.done [#allocation3], 16384
    $region25: #{shared_weight_forward.1} parent=1 // pred_fallthru
      _
    // Predicated region
    $region26: #{shared_weight_forward.1} parent=1 // pred_check
      _
    $region27: #{shared_weight_forward.1} parent=1 // pred_check_branch
      %46 = sbr.rel (0) target = $region29
    $region28: #{shared_weight_forward.1} parent=1 // pred_region
      %47 = dma.done [#allocation5], 8192
    $region29: #{shared_weight_forward.1} parent=1 // pred_fallthru
      _
    %v48 = vld [vmem:[%s0] sm:$0x3]
    %v49 = vld [vmem:[%s0 + $0x2] sm:$0x3]
    %v50 = vld [vmem:[%s0 + $0x4] sm:$0x3]
    %v51 = vld [vmem:[%s0 + $0x6] sm:$0x3]
    %v52 = vld [vmem:[%s0 + $0x8] sm:$0x3]
    %v53 = vld [vmem:[%s0 + $0xa] sm:$0x3]
    %v54 = vld [vmem:[%s0 + $0xc] sm:$0x3]
    %v55 = vld [vmem:[%s0 + $0xe] sm:$0x3]
    %v56 = vld [vmem:[#allocation2] sm:$0xff]
    %v57 = vld [vmem:[#allocation2 + $0x8] sm:$0xff]
    %v58 = vld [vmem:[#allocation2 + $0x10] sm:$0xff]
    %v59 = vld [vmem:[#allocation2 + $0x18] sm:$0xff]
    %v60 = vld [vmem:[#allocation2 + $0x20] sm:$0xff]
    %v61 = vld [vmem:[#allocation2 + $0x28] sm:$0xff]
    %v62 = vld [vmem:[#allocation2 + $0x30] sm:$0xff]
    %v63 = vld [vmem:[#allocation2 + $0x38] sm:$0xff]
    %v64 = vld [vmem:[#allocation2 + $0x40] sm:$0xff]
    %v65 = vld [vmem:[#allocation2 + $0x48] sm:$0xff]
    %v66 = vld [vmem:[#allocation2 + $0x50] sm:$0xff]
    %v67 = vld [vmem:[#allocation2 + $0x58] sm:$0xff]
    %v68 = vld [vmem:[#allocation2 + $0x60] sm:$0xff]
    %v69 = vld [vmem:[#allocation2 + $0x68] sm:$0xff]
    %v70 = vld [vmem:[#allocation2 + $0x70] sm:$0xff]
    %v71 = vld [vmem:[#allocation2 + $0x78] sm:$0xff]
    %v72 = vld [vmem:[#allocation2 + $0x80] sm:$0xff]
    %v73 = vld [vmem:[#allocation2 + $0x88] sm:$0xff]
    %v74 = vld [vmem:[#allocation2 + $0x90] sm:$0xff]
    %v75 = vld [vmem:[#allocation2 + $0x98] sm:$0xff]
    %v76 = vld [vmem:[#allocation2 + $0xa0] sm:$0xff]
    %v77 = vld [vmem:[#allocation2 + $0xa8] sm:$0xff]
    %v78 = vld [vmem:[#allocation2 + $0xb0] sm:$0xff]
    %v79 = vld [vmem:[#allocation2 + $0xb8] sm:$0xff]
    %v80 = vld [vmem:[#allocation2 + $0xc0] sm:$0xff]
    %v81 = vld [vmem:[#allocation2 + $0xc8] sm:$0xff]
    %v82 = vld [vmem:[#allocation2 + $0xd0] sm:$0xff]
    %v83 = vld [vmem:[#allocation2 + $0xd8] sm:$0xff]
    %v84 = vld [vmem:[#allocation2 + $0xe0] sm:$0xff]
    %v85 = vld [vmem:[#allocation2 + $0xe8] sm:$0xff]
    %v86 = vld [vmem:[#allocation2 + $0xf0] sm:$0xff]
    %v87 = vld [vmem:[#allocation2 + $0xf8] sm:$0xff]
    %v88 = vld [vmem:[#allocation2 + $0x100] sm:$0xff]
    %v89 = vld [vmem:[#allocation2 + $0x108] sm:$0xff]
    %v90 = vld [vmem:[#allocation2 + $0x110] sm:$0xff]
    %v91 = vld [vmem:[#allocation2 + $0x118] sm:$0xff]
    %v92 = vld [vmem:[#allocation2 + $0x120] sm:$0xff]
    %v93 = vld [vmem:[#allocation2 + $0x128] sm:$0xff]
    %v94 = vld [vmem:[#allocation2 + $0x130] sm:$0xff]
    %v95 = vld [vmem:[#allocation2 + $0x138] sm:$0xff]
    %v96 = vld [vmem:[#allocation2 + $0x140] sm:$0xff]
    %v97 = vld [vmem:[#allocation2 + $0x148] sm:$0xff]
    %v98 = vld [vmem:[#allocation2 + $0x150] sm:$0xff]
    %v99 = vld [vmem:[#allocation2 + $0x158] sm:$0xff]
    %v100 = vld [vmem:[#allocation2 + $0x160] sm:$0xff]
    %v101 = vld [vmem:[#allocation2 + $0x168] sm:$0xff]
    %v102 = vld [vmem:[#allocation2 + $0x170] sm:$0xff]
    %v103 = vld [vmem:[#allocation2 + $0x178] sm:$0xff]
    %v104 = vld [vmem:[#allocation2 + $0x180] sm:$0xff]
    %v105 = vld [vmem:[#allocation2 + $0x188] sm:$0xff]
    %v106 = vld [vmem:[#allocation2 + $0x190] sm:$0xff]
    %v107 = vld [vmem:[#allocation2 + $0x198] sm:$0xff]
    %v108 = vld [vmem:[#allocation2 + $0x1a0] sm:$0xff]
    %v109 = vld [vmem:[#allocation2 + $0x1a8] sm:$0xff]
    %v110 = vld [vmem:[#allocation2 + $0x1b0] sm:$0xff]
    %v111 = vld [vmem:[#allocation2 + $0x1b8] sm:$0xff]
    %v112 = vld [vmem:[#allocation2 + $0x1c0] sm:$0xff]
    %v113 = vld [vmem:[#allocation2 + $0x1c8] sm:$0xff]
    %v114 = vld [vmem:[#allocation2 + $0x1d0] sm:$0xff]
    %v115 = vld [vmem:[#allocation2 + $0x1d8] sm:$0xff]
    %v116 = vld [vmem:[#allocation2 + $0x1e0] sm:$0xff]
    %v117 = vld [vmem:[#allocation2 + $0x1e8] sm:$0xff]
    %v118 = vld [vmem:[#allocation2 + $0x1f0] sm:$0xff]
    %v119 = vld [vmem:[#allocation2 + $0x1f8] sm:$0xff]
    %v120 = vld [vmem:[#allocation2 + $0x200] sm:$0xff]
    %v121 = vld [vmem:[#allocation2 + $0x208] sm:$0xff]
    %v122 = vld [vmem:[#allocation2 + $0x210] sm:$0xff]
    %v123 = vld [vmem:[#allocation2 + $0x218] sm:$0xff]
    %v124 = vld [vmem:[#allocation2 + $0x220] sm:$0xff]
    %v125 = vld [vmem:[#allocation2 + $0x228] sm:$0xff]
    %v126 = vld [vmem:[#allocation2 + $0x230] sm:$0xff]
    %v127 = vld [vmem:[#allocation2 + $0x238] sm:$0xff]
    %v128 = vld [vmem:[#allocation2 + $0x240] sm:$0xff]
    %v129 = vld [vmem:[#allocation2 + $0x248] sm:$0xff]
    %v130 = vld [vmem:[#allocation2 + $0x250] sm:$0xff]
    %v131 = vld [vmem:[#allocation2 + $0x258] sm:$0xff]
    %v132 = vld [vmem:[#allocation2 + $0x260] sm:$0xff]
    %v133 = vld [vmem:[#allocation2 + $0x268] sm:$0xff]
    %v134 = vld [vmem:[#allocation2 + $0x270] sm:$0xff]
    %v135 = vld [vmem:[#allocation2 + $0x278] sm:$0xff]
    %v136 = vld [vmem:[#allocation2 + $0x280] sm:$0xff]
    %v137 = vld [vmem:[#allocation2 + $0x288] sm:$0xff]
    %v138 = vld [vmem:[#allocation2 + $0x290] sm:$0xff]
    %v139 = vld [vmem:[#allocation2 + $0x298] sm:$0xff]
    %v140 = vld [vmem:[#allocation2 + $0x2a0] sm:$0xff]
    %v141 = vld [vmem:[#allocation2 + $0x2a8] sm:$0xff]
    %v142 = vld [vmem:[#allocation2 + $0x2b0] sm:$0xff]
    %v143 = vld [vmem:[#allocation2 + $0x2b8] sm:$0xff]
    %v144 = vld [vmem:[#allocation2 + $0x2c0] sm:$0xff]
    %v145 = vld [vmem:[#allocation2 + $0x2c8] sm:$0xff]
    %v146 = vld [vmem:[#allocation2 + $0x2d0] sm:$0xff]
    %v147 = vld [vmem:[#allocation2 + $0x2d8] sm:$0xff]
    %v148 = vld [vmem:[#allocation2 + $0x2e0] sm:$0xff]
    %v149 = vld [vmem:[#allocation2 + $0x2e8] sm:$0xff]
    %v150 = vld [vmem:[#allocation2 + $0x2f0] sm:$0xff]
    %v151 = vld [vmem:[#allocation2 + $0x2f8] sm:$0xff]
    %v152 = vld [vmem:[#allocation2 + $0x300] sm:$0xff]
    %v153 = vld [vmem:[#allocation2 + $0x308] sm:$0xff]
    %v154 = vld [vmem:[#allocation2 + $0x310] sm:$0xff]
    %v155 = vld [vmem:[#allocation2 + $0x318] sm:$0xff]
    %v156 = vld [vmem:[#allocation2 + $0x320] sm:$0xff]
    %v157 = vld [vmem:[#allocation2 + $0x328] sm:$0xff]
    %v158 = vld [vmem:[#allocation2 + $0x330] sm:$0xff]
    %v159 = vld [vmem:[#allocation2 + $0x338] sm:$0xff]
    %v160 = vld [vmem:[#allocation2 + $0x340] sm:$0xff]
    %v161 = vld [vmem:[#allocation2 + $0x348] sm:$0xff]
    %v162 = vld [vmem:[#allocation2 + $0x350] sm:$0xff]
    %v163 = vld [vmem:[#allocation2 + $0x358] sm:$0xff]
    %v164 = vld [vmem:[#allocation2 + $0x360] sm:$0xff]
    %v165 = vld [vmem:[#allocation2 + $0x368] sm:$0xff]
    %v166 = vld [vmem:[#allocation2 + $0x370] sm:$0xff]
    %v167 = vld [vmem:[#allocation2 + $0x378] sm:$0xff]
    %v168 = vld [vmem:[#allocation2 + $0x380] sm:$0xff]
    %v169 = vld [vmem:[#allocation2 + $0x388] sm:$0xff]
    %v170 = vld [vmem:[#allocation2 + $0x390] sm:$0xff]
    %v171 = vld [vmem:[#allocation2 + $0x398] sm:$0xff]
    %v172 = vld [vmem:[#allocation2 + $0x3a0] sm:$0xff]
    %v173 = vld [vmem:[#allocation2 + $0x3a8] sm:$0xff]
    %v174 = vld [vmem:[#allocation2 + $0x3b0] sm:$0xff]
    %v175 = vld [vmem:[#allocation2 + $0x3b8] sm:$0xff]
    %v176 = vld [vmem:[#allocation2 + $0x3c0] sm:$0xff]
    %v177 = vld [vmem:[#allocation2 + $0x3c8] sm:$0xff]
    %v178 = vld [vmem:[#allocation2 + $0x3d0] sm:$0xff]
    %v179 = vld [vmem:[#allocation2 + $0x3d8] sm:$0xff]
    %v180 = vld [vmem:[#allocation2 + $0x3e0] sm:$0xff]
    %v181 = vld [vmem:[#allocation2 + $0x3e8] sm:$0xff]
    %v182 = vld [vmem:[#allocation2 + $0x3f0] sm:$0xff]
    %v183 = vld [vmem:[#allocation2 + $0x3f8] sm:$0xff]
    %v184 = vld [vmem:[%s2] sm:$0xf]
    %v186 = vlaneseq
    %v187 = vshrl.u32 %v186, 7
    %v188 = vsub.s32 0, %v187
    %v189 = vrot.slane %v184, %v188
    %v190 = vlaneseq
    %v191 = vshrl.u32 %v190, 7
    %v192 = vsub.s32 1, %v191
    %v193 = vrot.slane %v184, %v192
    %v194 = vlaneseq
    %v195 = vshrl.u32 %v194, 7
    %v196 = vsub.s32 2, %v195
    %v197 = vrot.slane %v184, %v196
    %v198 = vlaneseq
    %v199 = vshrl.u32 %v198, 7
    %v200 = vsub.s32 3, %v199
    %v201 = vrot.slane %v184, %v200
    %v214 = vcombine.low %v48, %v49
    %v215 = vcombine.low %v50, %v51
    %v216 = vcombine.low %v52, %v53
    %v217 = vcombine.low %v54, %v55
    %v219 = vunpack.c.l.s4 1966171168
    %v220 = vunpack.c.0.s8 %v219
    %v221 = vlaneseq
    %v222 = vshrl.u32 %v221, 7
    %v223 = vsub.s32 %v220, %v222
    %v224 = vrot.slane %v214, %v223
    %v226 = vunpack.c.l.s4 1966171168
    %v227 = vunpack.c.0.s8 %v226
    %v228 = vlaneseq
    %v229 = vshrl.u32 %v228, 7
    %v230 = vsub.s32 %v227, %v229
    %v231 = vrot.slane %v215, %v230
    %v233 = vunpack.c.l.s4 1966171168
    %v234 = vunpack.c.0.s8 %v233
    %v235 = vlaneseq
    %v236 = vshrl.u32 %v235, 7
    %v237 = vsub.s32 %v234, %v236
    %v238 = vrot.slane %v216, %v237
    %v240 = vunpack.c.l.s4 1966171168
    %v241 = vunpack.c.0.s8 %v240
    %v242 = vlaneseq
    %v243 = vshrl.u32 %v242, 7
    %v244 = vsub.s32 %v241, %v243
    %v245 = vrot.slane %v217, %v244
    %v246 = vcombine.low %v224, %v231
    %v247 = vcombine.high %v224, %v231
    %v248 = vcombine.low %v238, %v245
    %v249 = vcombine.high %v238, %v245
    %v251 = vunpack.c.l.s4 1966171168
    %v252 = vunpack.c.0.s8 %v251
    %v253 = vlaneseq
    %v254 = vshrl.u32 %v253, 7
    %v255 = vsub.s32 %v252, %v254
    %v256 = vrot.slane %v246, %v255
    %v258 = vunpack.c.l.s4 1966171168
    %v259 = vunpack.c.0.s8 %v258
    %v260 = vlaneseq
    %v261 = vshrl.u32 %v260, 7
    %v262 = vsub.s32 %v259, %v261
    %v263 = vrot.slane %v247, %v262
    %v265 = vunpack.c.l.s4 1966171168
    %v266 = vunpack.c.0.s8 %v265
    %v267 = vlaneseq
    %v268 = vshrl.u32 %v267, 7
    %v269 = vsub.s32 %v266, %v268
    %v270 = vrot.slane %v248, %v269
    %v272 = vunpack.c.l.s4 1966171168
    %v273 = vunpack.c.0.s8 %v272
    %v274 = vlaneseq
    %v275 = vshrl.u32 %v274, 7
    %v276 = vsub.s32 %v273, %v275
    %v277 = vrot.slane %v249, %v276
    %v278 = vcombine.low %v256, %v270
    %v279 = vcombine.low %v263, %v277
    %282 = vmatprep.subr.mxu0 %v57
    %283 = vmatpush1.msra.mxu0 %v56
    %284 = vmatprep.subr.mxu0 %v61
    %285 = vmatpush1.msra.mxu0 %v60
    %286 = vmatprep.subr.mxu0 %v65
    %287 = vmatpush1.msra.mxu0 %v64
    %288 = vmatprep.subr.mxu0 %v69
    %289 = vmatpush1.msra.mxu0 %v68
    %290 = vmatprep.subr.mxu0 %v73
    %291 = vmatpush1.msra.mxu0 %v72
    %292 = vmatprep.subr.mxu0 %v77
    %293 = vmatpush1.msra.mxu0 %v76
    %294 = vmatprep.subr.mxu0 %v81
    %295 = vmatpush1.msra.mxu0 %v80
    %296 = vmatprep.subr.mxu0 %v85
    %297 = vmatpush1.msra.mxu0 %v84
    %298 = vmatprep.subr.mxu0 %v89
    %299 = vmatpush1.msra.mxu0 %v88
    %300 = vmatprep.subr.mxu0 %v93
    %301 = vmatpush1.msra.mxu0 %v92
    %302 = vmatprep.subr.mxu0 %v97
    %303 = vmatpush1.msra.mxu0 %v96
    %304 = vmatprep.subr.mxu0 %v101
    %305 = vmatpush1.msra.mxu0 %v100
    %306 = vmatprep.subr.mxu0 %v105
    %307 = vmatpush1.msra.mxu0 %v104
    %308 = vmatprep.subr.mxu0 %v109
    %309 = vmatpush1.msra.mxu0 %v108
    %310 = vmatprep.subr.mxu0 %v113
    %311 = vmatpush1.msra.mxu0 %v112
    %312 = vmatprep.subr.mxu0 %v117
    %313 = vmatpush1.msra.mxu0 %v116
    %314 = vmatprep.subr.mxu0 %v121
    %315 = vmatpush1.msra.mxu0 %v120
    %316 = vmatprep.subr.mxu0 %v125
    %317 = vmatpush1.msra.mxu0 %v124
    %318 = vmatprep.subr.mxu0 %v129
    %319 = vmatpush1.msra.mxu0 %v128
    %320 = vmatprep.subr.mxu0 %v133
    %321 = vmatpush1.msra.mxu0 %v132
    %322 = vmatprep.subr.mxu0 %v137
    %323 = vmatpush1.msra.mxu0 %v136
    %324 = vmatprep.subr.mxu0 %v141
    %325 = vmatpush1.msra.mxu0 %v140
    %326 = vmatprep.subr.mxu0 %v145
    %327 = vmatpush1.msra.mxu0 %v144
    %328 = vmatprep.subr.mxu0 %v149
    %329 = vmatpush1.msra.mxu0 %v148
    %330 = vmatprep.subr.mxu0 %v153
    %331 = vmatpush1.msra.mxu0 %v152
    %332 = vmatprep.subr.mxu0 %v157
    %333 = vmatpush1.msra.mxu0 %v156
    %334 = vmatprep.subr.mxu0 %v161
    %335 = vmatpush1.msra.mxu0 %v160
    %336 = vmatprep.subr.mxu0 %v165
    %337 = vmatpush1.msra.mxu0 %v164
    %338 = vmatprep.subr.mxu0 %v169
    %339 = vmatpush1.msra.mxu0 %v168
    %340 = vmatprep.subr.mxu0 %v173
    %341 = vmatpush1.msra.mxu0 %v172
    %342 = vmatprep.subr.mxu0 %v177
    %343 = vmatpush1.msra.mxu0 %v176
    %344 = vmatprep.subr.mxu0 %v181
    %345 = vmatpush1.msra.mxu0 %v180
    %346 = vmatprep.mubr.f32.mxu0 %v279
    %347 = vmatmul.mubr.f32.gmra.mrb[0].mxu0 %v278
    %v348 = vpop.f32.mrb[0].mxu0
    %v349 = vadd.f32 %v189, %v348
    %v350 = vpop.f32.mrb[0].mxu0
    %v351 = vadd.f32 %v193, %v350
    %352 = vdwg.mxu0
    %353 = vmatprep.subr.mxu0 %v59
    %354 = vmatpush1.msra.mxu0 %v58
    %355 = vmatprep.subr.mxu0 %v63
    %356 = vmatpush1.msra.mxu0 %v62
    %357 = vmatprep.subr.mxu0 %v67
    %358 = vmatpush1.msra.mxu0 %v66
    %359 = vmatprep.subr.mxu0 %v71
    %360 = vmatpush1.msra.mxu0 %v70
    %361 = vmatprep.subr.mxu0 %v75
    %362 = vmatpush1.msra.mxu0 %v74
    %363 = vmatprep.subr.mxu0 %v79
    %364 = vmatpush1.msra.mxu0 %v78
    %365 = vmatprep.subr.mxu0 %v83
    %366 = vmatpush1.msra.mxu0 %v82
    %367 = vmatprep.subr.mxu0 %v87
    %368 = vmatpush1.msra.mxu0 %v86
    %369 = vmatprep.subr.mxu0 %v91
    %370 = vmatpush1.msra.mxu0 %v90
    %371 = vmatprep.subr.mxu0 %v95
    %372 = vmatpush1.msra.mxu0 %v94
    %373 = vmatprep.subr.mxu0 %v99
    %374 = vmatpush1.msra.mxu0 %v98
    %375 = vmatprep.subr.mxu0 %v103
    %376 = vmatpush1.msra.mxu0 %v102
    %377 = vmatprep.subr.mxu0 %v107
    %378 = vmatpush1.msra.mxu0 %v106
    %379 = vmatprep.subr.mxu0 %v111
    %380 = vmatpush1.msra.mxu0 %v110
    %381 = vmatprep.subr.mxu0 %v115
    %382 = vmatpush1.msra.mxu0 %v114
    %383 = vmatprep.subr.mxu0 %v119
    %384 = vmatpush1.msra.mxu0 %v118
    %385 = vmatprep.subr.mxu0 %v123
    %386 = vmatpush1.msra.mxu0 %v122
    %387 = vmatprep.subr.mxu0 %v127
    %388 = vmatpush1.msra.mxu0 %v126
    %389 = vmatprep.subr.mxu0 %v131
    %390 = vmatpush1.msra.mxu0 %v130
    %391 = vmatprep.subr.mxu0 %v135
    %392 = vmatpush1.msra.mxu0 %v134
    %393 = vmatprep.subr.mxu0 %v139
    %394 = vmatpush1.msra.mxu0 %v138
    %395 = vmatprep.subr.mxu0 %v143
    %396 = vmatpush1.msra.mxu0 %v142
    %397 = vmatprep.subr.mxu0 %v147
    %398 = vmatpush1.msra.mxu0 %v146
    %399 = vmatprep.subr.mxu0 %v151
    %400 = vmatpush1.msra.mxu0 %v150
    %401 = vmatprep.subr.mxu0 %v155
    %402 = vmatpush1.msra.mxu0 %v154
    %403 = vmatprep.subr.mxu0 %v159
    %404 = vmatpush1.msra.mxu0 %v158
    %405 = vmatprep.subr.mxu0 %v163
    %406 = vmatpush1.msra.mxu0 %v162
    %407 = vmatprep.subr.mxu0 %v167
    %408 = vmatpush1.msra.mxu0 %v166
    %409 = vmatprep.subr.mxu0 %v171
    %410 = vmatpush1.msra.mxu0 %v170
    %411 = vmatprep.subr.mxu0 %v175
    %412 = vmatpush1.msra.mxu0 %v174
    %413 = vmatprep.subr.mxu0 %v179
    %414 = vmatpush1.msra.mxu0 %v178
    %415 = vmatprep.subr.mxu0 %v183
    %416 = vmatpush1.msra.mxu0 %v182
    %417 = vmatprep.mubr.f32.mxu0 %v279
    %418 = vmatmul.mubr.f32.gmra.mrb[0].mxu0 %v278
    %v419 = vpop.f32.mrb[0].mxu0
    %v420 = vadd.f32 %v197, %v419
    %v421 = vpop.f32.mrb[0].mxu0
    %v422 = vadd.f32 %v201, %v421
    %423 = vdwg.mxu0
    %v424 = vmax.f32 %v349, 0.0
    %v425 = vmax.f32 %v351, 0.0
    %v426 = vmax.f32 %v420, 0.0
    %v427 = vmax.f32 %v422, 0.0
    %v428 = vld [vmem:[#allocation4] sm:$0xff]
    %v429 = vld [vmem:[#allocation4 + $0x8] sm:$0xff]
    %v430 = vld [vmem:[#allocation4 + $0x10] sm:$0xff]
    %v431 = vld [vmem:[#allocation4 + $0x18] sm:$0xff]
    %v432 = vld [vmem:[#allocation4 + $0x20] sm:$0xff]
    %v433 = vld [vmem:[#allocation4 + $0x28] sm:$0xff]
    %v434 = vld [vmem:[#allocation4 + $0x30] sm:$0xff]
    %v435 = vld [vmem:[#allocation4 + $0x38] sm:$0xff]
    %v436 = vld [vmem:[#allocation4 + $0x40] sm:$0xff]
    %v437 = vld [vmem:[#allocation4 + $0x48] sm:$0xff]
    %v438 = vld [vmem:[#allocation4 + $0x50] sm:$0xff]
    %v439 = vld [vmem:[#allocation4 + $0x58] sm:$0xff]
    %v440 = vld [vmem:[#allocation4 + $0x60] sm:$0xff]
    %v441 = vld [vmem:[#allocation4 + $0x68] sm:$0xff]
    %v442 = vld [vmem:[#allocation4 + $0x70] sm:$0xff]
    %v443 = vld [vmem:[#allocation4 + $0x78] sm:$0xff]
    %v444 = vld [vmem:[#allocation4 + $0x80] sm:$0xff]
    %v445 = vld [vmem:[#allocation4 + $0x88] sm:$0xff]
    %v446 = vld [vmem:[#allocation4 + $0x90] sm:$0xff]
    %v447 = vld [vmem:[#allocation4 + $0x98] sm:$0xff]
    %v448 = vld [vmem:[#allocation4 + $0xa0] sm:$0xff]
    %v449 = vld [vmem:[#allocation4 + $0xa8] sm:$0xff]
    %v450 = vld [vmem:[#allocation4 + $0xb0] sm:$0xff]
    %v451 = vld [vmem:[#allocation4 + $0xb8] sm:$0xff]
    %v452 = vld [vmem:[#allocation4 + $0xc0] sm:$0xff]
    %v453 = vld [vmem:[#allocation4 + $0xc8] sm:$0xff]
    %v454 = vld [vmem:[#allocation4 + $0xd0] sm:$0xff]
    %v455 = vld [vmem:[#allocation4 + $0xd8] sm:$0xff]
    %v456 = vld [vmem:[#allocation4 + $0xe0] sm:$0xff]
    %v457 = vld [vmem:[#allocation4 + $0xe8] sm:$0xff]
    %v458 = vld [vmem:[#allocation4 + $0xf0] sm:$0xff]
    %v459 = vld [vmem:[#allocation4 + $0xf8] sm:$0xff]
    %v460 = vld [vmem:[#allocation4 + $0x100] sm:$0xff]
    %v461 = vld [vmem:[#allocation4 + $0x108] sm:$0xff]
    %v462 = vld [vmem:[#allocation4 + $0x110] sm:$0xff]
    %v463 = vld [vmem:[#allocation4 + $0x118] sm:$0xff]
    %v464 = vld [vmem:[#allocation4 + $0x120] sm:$0xff]
    %v465 = vld [vmem:[#allocation4 + $0x128] sm:$0xff]
    %v466 = vld [vmem:[#allocation4 + $0x130] sm:$0xff]
    %v467 = vld [vmem:[#allocation4 + $0x138] sm:$0xff]
    %v468 = vld [vmem:[#allocation4 + $0x140] sm:$0xff]
    %v469 = vld [vmem:[#allocation4 + $0x148] sm:$0xff]
    %v470 = vld [vmem:[#allocation4 + $0x150] sm:$0xff]
    %v471 = vld [vmem:[#allocation4 + $0x158] sm:$0xff]
    %v472 = vld [vmem:[#allocation4 + $0x160] sm:$0xff]
    %v473 = vld [vmem:[#allocation4 + $0x168] sm:$0xff]
    %v474 = vld [vmem:[#allocation4 + $0x170] sm:$0xff]
    %v475 = vld [vmem:[#allocation4 + $0x178] sm:$0xff]
    %v476 = vld [vmem:[#allocation4 + $0x180] sm:$0xff]
    %v477 = vld [vmem:[#allocation4 + $0x188] sm:$0xff]
    %v478 = vld [vmem:[#allocation4 + $0x190] sm:$0xff]
    %v479 = vld [vmem:[#allocation4 + $0x198] sm:$0xff]
    %v480 = vld [vmem:[#allocation4 + $0x1a0] sm:$0xff]
    %v481 = vld [vmem:[#allocation4 + $0x1a8] sm:$0xff]
    %v482 = vld [vmem:[#allocation4 + $0x1b0] sm:$0xff]
    %v483 = vld [vmem:[#allocation4 + $0x1b8] sm:$0xff]
    %v484 = vld [vmem:[#allocation4 + $0x1c0] sm:$0xff]
    %v485 = vld [vmem:[#allocation4 + $0x1c8] sm:$0xff]
    %v486 = vld [vmem:[#allocation4 + $0x1d0] sm:$0xff]
    %v487 = vld [vmem:[#allocation4 + $0x1d8] sm:$0xff]
    %v488 = vld [vmem:[#allocation4 + $0x1e0] sm:$0xff]
    %v489 = vld [vmem:[#allocation4 + $0x1e8] sm:$0xff]
    %v490 = vld [vmem:[#allocation4 + $0x1f0] sm:$0xff]
    %v491 = vld [vmem:[#allocation4 + $0x1f8] sm:$0xff]
    %v492 = vld [vmem:[%s4] sm:$0x1]
    %v494 = vlaneseq
    %v495 = vshrl.u32 %v494, 7
    %v496 = vsub.s32 0, %v495
    %v497 = vrot.slane %v492, %v496
    %499 = vmatprep.subr.mxu0 0.0
    %500 = vmatpush1.msra.mxu0 %v428
    %501 = vmatprep.subr.mxu0 0.0
    %502 = vmatpush1.msra.mxu0 %v429
    %503 = vmatprep.subr.mxu0 0.0
    %504 = vmatpush1.msra.mxu0 %v430
    %505 = vmatprep.subr.mxu0 0.0
    %506 = vmatpush1.msra.mxu0 %v431
    %507 = vmatprep.subr.mxu0 0.0
    %508 = vmatpush1.msra.mxu0 %v432
    %509 = vmatprep.subr.mxu0 0.0
    %510 = vmatpush1.msra.mxu0 %v433
    %511 = vmatprep.subr.mxu0 0.0
    %512 = vmatpush1.msra.mxu0 %v434
    %513 = vmatprep.subr.mxu0 0.0
    %514 = vmatpush1.msra.mxu0 %v435
    %515 = vmatprep.subr.mxu0 0.0
    %516 = vmatpush1.msra.mxu0 %v436
    %517 = vmatprep.subr.mxu0 0.0
    %518 = vmatpush1.msra.mxu0 %v437
    %519 = vmatprep.subr.mxu0 0.0
    %520 = vmatpush1.msra.mxu0 %v438
    %521 = vmatprep.subr.mxu0 0.0
    %522 = vmatpush1.msra.mxu0 %v439
    %523 = vmatprep.subr.mxu0 0.0
    %524 = vmatpush1.msra.mxu0 %v440
    %525 = vmatprep.subr.mxu0 0.0
    %526 = vmatpush1.msra.mxu0 %v441
    %527 = vmatprep.subr.mxu0 0.0
    %528 = vmatpush1.msra.mxu0 %v442
    %529 = vmatprep.subr.mxu0 0.0
    %530 = vmatpush1.msra.mxu0 %v443
    %531 = vmatprep.subr.mxu0 0.0
    %532 = vmatpush1.msra.mxu0 %v444
    %533 = vmatprep.subr.mxu0 0.0
    %534 = vmatpush1.msra.mxu0 %v445
    %535 = vmatprep.subr.mxu0 0.0
    %536 = vmatpush1.msra.mxu0 %v446
    %537 = vmatprep.subr.mxu0 0.0
    %538 = vmatpush1.msra.mxu0 %v447
    %539 = vmatprep.subr.mxu0 0.0
    %540 = vmatpush1.msra.mxu0 %v448
    %541 = vmatprep.subr.mxu0 0.0
    %542 = vmatpush1.msra.mxu0 %v449
    %543 = vmatprep.subr.mxu0 0.0
    %544 = vmatpush1.msra.mxu0 %v450
    %545 = vmatprep.subr.mxu0 0.0
    %546 = vmatpush1.msra.mxu0 %v451
    %547 = vmatprep.subr.mxu0 0.0
    %548 = vmatpush1.msra.mxu0 %v452
    %549 = vmatprep.subr.mxu0 0.0
    %550 = vmatpush1.msra.mxu0 %v453
    %551 = vmatprep.subr.mxu0 0.0
    %552 = vmatpush1.msra.mxu0 %v454
    %553 = vmatprep.subr.mxu0 0.0
    %554 = vmatpush1.msra.mxu0 %v455
    %555 = vmatprep.subr.mxu0 0.0
    %556 = vmatpush1.msra.mxu0 %v456
    %557 = vmatprep.subr.mxu0 0.0
    %558 = vmatpush1.msra.mxu0 %v457
    %559 = vmatprep.subr.mxu0 0.0
    %560 = vmatpush1.msra.mxu0 %v458
    %561 = vmatprep.subr.mxu0 0.0
    %562 = vmatpush1.msra.mxu0 %v459
    %563 = vmatprep.mubr.f32.mxu0 %v425
    %564 = vmatmul.mubr.f32.gmra.mrb[0].mxu0 %v424
    %v565 = vpop.f32.mrb[0].mxu0
    %v566 = vadd.f32 %v497, %v565
    %v567 = vpop.f32.mrb[0].mxu0
    %568 = vdwg.mxu0
    %569 = vmatprep.subr.mxu0 0.0
    %570 = vmatpush1.msra.mxu0 %v460
    %571 = vmatprep.subr.mxu0 0.0
    %572 = vmatpush1.msra.mxu0 %v461
    %573 = vmatprep.subr.mxu0 0.0
    %574 = vmatpush1.msra.mxu0 %v462
    %575 = vmatprep.subr.mxu0 0.0
    %576 = vmatpush1.msra.mxu0 %v463
    %577 = vmatprep.subr.mxu0 0.0
    %578 = vmatpush1.msra.mxu0 %v464
    %579 = vmatprep.subr.mxu0 0.0
    %580 = vmatpush1.msra.mxu0 %v465
    %581 = vmatprep.subr.mxu0 0.0
    %582 = vmatpush1.msra.mxu0 %v466
    %583 = vmatprep.subr.mxu0 0.0
    %584 = vmatpush1.msra.mxu0 %v467
    %585 = vmatprep.subr.mxu0 0.0
    %586 = vmatpush1.msra.mxu0 %v468
    %587 = vmatprep.subr.mxu0 0.0
    %588 = vmatpush1.msra.mxu0 %v469
    %589 = vmatprep.subr.mxu0 0.0
    %590 = vmatpush1.msra.mxu0 %v470
    %591 = vmatprep.subr.mxu0 0.0
    %592 = vmatpush1.msra.mxu0 %v471
    %593 = vmatprep.subr.mxu0 0.0
    %594 = vmatpush1.msra.mxu0 %v472
    %595 = vmatprep.subr.mxu0 0.0
    %596 = vmatpush1.msra.mxu0 %v473
    %597 = vmatprep.subr.mxu0 0.0
    %598 = vmatpush1.msra.mxu0 %v474
    %599 = vmatprep.subr.mxu0 0.0
    %600 = vmatpush1.msra.mxu0 %v475
    %601 = vmatprep.subr.mxu0 0.0
    %602 = vmatpush1.msra.mxu0 %v476
    %603 = vmatprep.subr.mxu0 0.0
    %604 = vmatpush1.msra.mxu0 %v477
    %605 = vmatprep.subr.mxu0 0.0
    %606 = vmatpush1.msra.mxu0 %v478
    %607 = vmatprep.subr.mxu0 0.0
    %608 = vmatpush1.msra.mxu0 %v479
    %609 = vmatprep.subr.mxu0 0.0
    %610 = vmatpush1.msra.mxu0 %v480
    %611 = vmatprep.subr.mxu0 0.0
    %612 = vmatpush1.msra.mxu0 %v481
    %613 = vmatprep.subr.mxu0 0.0
    %614 = vmatpush1.msra.mxu0 %v482
    %615 = vmatprep.subr.mxu0 0.0
    %616 = vmatpush1.msra.mxu0 %v483
    %617 = vmatprep.subr.mxu0 0.0
    %618 = vmatpush1.msra.mxu0 %v484
    %619 = vmatprep.subr.mxu0 0.0
    %620 = vmatpush1.msra.mxu0 %v485
    %621 = vmatprep.subr.mxu0 0.0
    %622 = vmatpush1.msra.mxu0 %v486
    %623 = vmatprep.subr.mxu0 0.0
    %624 = vmatpush1.msra.mxu0 %v487
    %625 = vmatprep.subr.mxu0 0.0
    %626 = vmatpush1.msra.mxu0 %v488
    %627 = vmatprep.subr.mxu0 0.0
    %628 = vmatpush1.msra.mxu0 %v489
    %629 = vmatprep.subr.mxu0 0.0
    %630 = vmatpush1.msra.mxu0 %v490
    %631 = vmatprep.subr.mxu0 0.0
    %632 = vmatpush1.msra.mxu0 %v491
    %633 = vmatprep.mubr.f32.mxu0 %v427
    %634 = vmatmul.mubr.f32.gmra.mrb[0].mxu0 %v426
    %v635 = vpop.f32.mrb[0].mxu0
    %v636 = vadd.f32 %v566, %v635
    %v637 = vpop.f32.mrb[0].mxu0
    %638 = vdwg.mxu0
    %639 = vst [vmem:[#allocation6] sm:$0xff] %v636
    // Predicated region
    $region30: #{shared_weight_forward.1} parent=1 // pred_check
      _
    $region31: #{shared_weight_forward.1} parent=1 // pred_check_branch
      %641 = sbr.rel (0) target = $region33
    $region32: #{shared_weight_forward.1} parent=1 // pred_region
      // Predicated region
      $region34: #{shared_weight_forward.1} parent=32 // pred_check
        _
      $region35: #{shared_weight_forward.1} parent=32 // pred_check_branch
        %643 = sbr.rel (0) target = $region37
      $region36: #{shared_weight_forward.1} parent=32 // pred_region
        // Predicated region
        $region38: #{shared_weight_forward.1} parent=36 // pred_check
          _
        $region39: #{shared_weight_forward.1} parent=36 // pred_check_branch
          %645 = sbr.rel target = $region41
        $region40: #{shared_weight_forward.1} parent=36 // pred_region
          // Predicated region
          $region53: #{shared_weight_forward.1} parent=40 // pred_check
            _
          $region54: #{shared_weight_forward.1} parent=40 // pred_check_branch
            %660 = sbr.rel (0) target = $region56
          $region55: #{shared_weight_forward.1} parent=40 // pred_region
            loop: start=0, step=1, limit=1
            $region57: #{shared_weight_forward.1} parent=55 // loop_pre_header
              _
            $region58: #{shared_weight_forward.1} parent=55 // loop_header
              %s663 = sphi 0, %s667
              %p664 = scmp.ge.s32.totalorder %s663, 1
              %s668 = sphi [#allocation6], [#allocation6]
              %s669 = sphi %s5, %s5
            $region59: #{shared_weight_forward.1} parent=55 // loop_header_branch
              %666 = sbr.rel (%p664) target = $region63
            $region60: #{shared_weight_forward.1} parent=55 // loop_body
              %v670 = vld [vmem:[%s668] sm:$0x1]
              %671 = vst [vmem:[%s669] sm:$0x1] %v670
            $region61: #{shared_weight_forward.1} parent=55 // loop_footer
              %s667 = sadd.s32 1, %s663
            $region62: #{shared_weight_forward.1} parent=55 // loop_footer_branch
              %662 = sbr.rel target = $region58
            $region63: #{shared_weight_forward.1} parent=55 // loop_exit
              _
          $region56: #{shared_weight_forward.1} parent=40 // pred_fallthru
            _
        $region41: #{shared_weight_forward.1} parent=36 // pred_fallthru
          _
        // Predicated region
        $region42: #{shared_weight_forward.1} parent=36 // pred_check
          _
        $region43: #{shared_weight_forward.1} parent=36 // pred_check_branch
          %647 = sbr.rel (0) target = $region45
        $region44: #{shared_weight_forward.1} parent=36 // pred_region
          loop: start=0, step=1, limit=1
          $region46: #{shared_weight_forward.1} parent=44 // loop_pre_header
            _
          $region47: #{shared_weight_forward.1} parent=44 // loop_header
            %s650 = sphi 0, %s654
            %p651 = scmp.ge.s32.totalorder %s650, 1
            %s655 = sphi [#allocation6], [#allocation6]
            %s656 = sphi %s5, %s5
          $region48: #{shared_weight_forward.1} parent=44 // loop_header_branch
            %653 = sbr.rel (%p651) target = $region52
          $region49: #{shared_weight_forward.1} parent=44 // loop_body
            %v657 = vld [vmem:[%s655] sm:$0x1]
            %658 = vst [vmem:[%s656] sm:$0x1] %v657
          $region50: #{shared_weight_forward.1} parent=44 // loop_footer
            %s654 = sadd.s32 1, %s650
          $region51: #{shared_weight_forward.1} parent=44 // loop_footer_branch
            %649 = sbr.rel target = $region47
          $region52: #{shared_weight_forward.1} parent=44 // loop_exit
            _
        $region45: #{shared_weight_forward.1} parent=36 // pred_fallthru
          _
      $region37: #{shared_weight_forward.1} parent=32 // pred_fallthru
        _
      %672 = vnop
    $region33: #{shared_weight_forward.1} parent=1 // pred_fallthru
      _
    // Predicated region
    $region64: #{shared_weight_forward.1} parent=1 // pred_check
      _
    $region65: #{shared_weight_forward.1} parent=1 // pred_check_branch
      %674 = sbr.rel (0) target = $region67
    $region66: #{shared_weight_forward.1} parent=1 // pred_region
      _
    $region67: #{shared_weight_forward.1} parent=1 // pred_fallthru
      _
    %675 = vsyncpa [#allocation3], 1
    %676 = vsyncpa [#allocation5], 1

</llo_original>
